<compile_context>
chip_gen: v7x
topology: tpu7x:2x2x1
jax: 0.10.0
libtpu: 0.0.40
codegen_flags: <defaults>
</compile_context>

<pallas_src>
import functools

import jax
import jax.numpy as jnp
import numpy as np
from jax import lax
from jax.experimental import pallas as pl
from jax.experimental.pallas import tpu as pltpu


# ----------------------------- GroupNorm statistics --------------------------

def _plane_stats_kernel(x_ref, mask_ref, ssum_ref, ssq_ref):
    """Per-(b, c) sum / sumsq over interior voxels, accumulated over depth."""
    d = pl.program_id(1)

    @pl.when(d == 0)
    def _():
        ssum_ref[...] = jnp.zeros_like(ssum_ref)
        ssq_ref[...] = jnp.zeros_like(ssq_ref)

    x = x_ref[...][0, 0].astype(jnp.float32) * mask_ref[...]        # (C, HWp)
    ssum_ref[...] += jnp.sum(x, axis=1, keepdims=True)[None]
    ssq_ref[...] += jnp.sum(x * x, axis=1, keepdims=True)[None]


def _plane_stats(xf, mask):
    """xf: (B, D, C, HWp) padded-flat.  Returns per-(b, c) sum and sumsq."""
    B, D, C, HWp = xf.shape
    return pl.pallas_call(
        _plane_stats_kernel,
        out_shape=(jax.ShapeDtypeStruct((B, C, 1), jnp.float32),
                   jax.ShapeDtypeStruct((B, C, 1), jnp.float32)),
        grid=(B, D),
        in_specs=[pl.BlockSpec((1, 1, C, HWp), lambda b, d: (b, d, 0, 0)),
                  pl.BlockSpec((1, HWp), lambda b, d: (0, 0))],
        out_specs=(pl.BlockSpec((1, C, 1), lambda b, d: (b, 0, 0)),
                   pl.BlockSpec((1, C, 1), lambda b, d: (b, 0, 0))),
        compiler_params=pltpu.CompilerParams(
            dimension_semantics=("parallel", "arbitrary")),
    )(xf, mask)


def _gn_finalize(ssum, ssq, gamma, beta, groups, count, eps):
    """(B, C, 1) channel sums -> per-(b, c) GN affine scale/shift (tiny, plain
    JAX: O(B*C) scalars)."""
    B, C, _ = ssum.shape
    cg = C // groups
    s_g = ssum[..., 0].reshape(B, groups, cg).sum(axis=2)           # (B, G)
    q_g = ssq[..., 0].reshape(B, groups, cg).sum(axis=2)
    n = float(count * cg)
    mean_g = s_g / n
    # single-pass variance in f32; clamp guards tiny negative cancellation.
    var_g = jnp.maximum(q_g / n - mean_g * mean_g, 0.0)
    inv_g = lax.rsqrt(var_g + eps)
    mean_c = jnp.repeat(mean_g, cg, axis=1)                         # (B, C)
    inv_c = jnp.repeat(inv_g, cg, axis=1)
    scale = gamma[None, :] * inv_c
    shift = beta[None, :] - mean_c * scale
    return scale[:, :, None], shift[:, :, None]                     # (B, C, 1)


# ------------------- fused GroupNorm-apply + 3x3x3 conv kernels --------------

def _gn_stack(planes, scale_ref, shift_ref, mask, d, *, D, taps, C, xstk_ref):
    """GroupNorm-apply the three (clamped) depth planes and write the 27
    spatially shifted copies into the K-stacked GEMM input rows [0, 27*C).

    Shifts are pltpu.roll lane rotations (XLU); wrap-around only ever lands in
    the padded border columns, which are forced to zero by `mask`."""
    scale = scale_ref[...][0]                                       # (C, 1)
    shift = shift_ref[...][0]
    hwp = mask.shape[1]
    n_taps = len(taps)
    for kd in range(3):
        src = d + kd - 1
        dv = jnp.where((src >= 0) & (src <= D - 1),
                       1.0, 0.0).astype(jnp.float32)                # depth pad
        xk = planes[kd][...][0, 0].astype(jnp.float32)              # (C, HWp)
        xn = (xk * scale + shift) * (mask * dv)                     # zero border
        for t, sh in enumerate(taps):
            piece = xn if sh == 0 else pltpu.roll(xn, (-sh) % hwp, 1)
            k = kd * n_taps + t
            xstk_ref[k * C:(k + 1) * C, :] = piece


def _conv1_kernel(xm, x0, xp, scale_ref, shift_ref, mask_ref, w_ref, b_ref,
                  o_ref, ssum_ref, ssq_ref, xstk_ref, *, D, taps, Cin):
    """GN1-apply + conv1(3x3x3) as one K-stacked GEMM + bias + ReLU for one
    (batch, depth) plane; GroupNorm2 statistics fused into the epilogue."""
    d = pl.program_id(1)
    mask = mask_ref[...]                                            # (1, HWp)
    _gn_stack((xm, x0, xp), scale_ref, shift_ref, mask, d,
              D=D, taps=taps, C=Cin, xstk_ref=xstk_ref)
    y = jnp.dot(w_ref[...], xstk_ref[...],
                preferred_element_type=jnp.float32)                 # (F, HWp)
    res = jnp.maximum(y + b_ref[...], 0.0) * mask                   # exact 0 border
    o_ref[...] = res[None, None].astype(o_ref.dtype)

    # fused GN2 statistics: avoids a second full HBM pass over h1.
    @pl.when(d == 0)
    def _():
        ssum_ref[...] = jnp.zeros_like(ssum_ref)
        ssq_ref[...] = jnp.zeros_like(ssq_ref)

    ssum_ref[...] += jnp.sum(res, axis=1, keepdims=True)[None]
    ssq_ref[...] += jnp.sum(res * res, axis=1, keepdims=True)[None]


def _conv2_kernel(xm, x0, xp, xs_ref, scale_ref, shift_ref, mask_ref, w_ref,
                  b_ref, o_ref, xstk_ref, *, D, taps, Cin, Fout):
    """GN2-apply + conv2(3x3x3) + bias + ReLU, with the 1x1x1 shortcut conv
    (+ReLU) folded into the SAME GEMM: raw x plane appended as extra K rows,
    shortcut filters appended as extra M rows."""
    d = pl.program_id(1)
    mask = mask_ref[...]
    _gn_stack((xm, x0, xp), scale_ref, shift_ref, mask, d,
              D=D, taps=taps, C=Cin, xstk_ref=xstk_ref)
    xstk_ref[27 * Cin:, :] = xs_ref[...][0, 0].astype(jnp.float32)  # raw x plane
    y = jnp.dot(w_ref[...], xstk_ref[...],
                preferred_element_type=jnp.float32) + b_ref[...]    # (2F, HWp)
    res = (jnp.maximum(y[:Fout], 0.0) + jnp.maximum(y[Fout:], 0.0)) * mask
    o_ref[...] = res[None, None].astype(o_ref.dtype)


def _fused_gn_conv3d(xin, scale, shift, mask, w, bias, *, D, H, W, out_filters,
                     emit_stats=False, shortcut_x=None):
    """xin: (B, D, Cin, HWp) padded-flat (zero H/W borders), spatial on lanes.
    Returns (B, D, out_filters, HWp) [+ per-channel sum/sumsq if emit_stats].

    TODO(synk): replace the three clamped plane fetches with a rolling 3-slot
    VMEM window (manual DMA) to cut the 3x HBM read amplification."""
    B, _, Cin, HWp = xin.shape
    Wp = W + 2
    taps = tuple((kh - 1) * Wp + (kw - 1) for kh in range(3) for kw in range(3))
    K = w.shape[1]

    def plane_spec(off):
        return pl.BlockSpec(
            (1, 1, Cin, HWp),
            lambda b, d, off=off: (b, jnp.minimum(jnp.maximum(d + off, 0), D - 1),
                                   0, 0))

    in_specs = [plane_spec(-1), plane_spec(0), plane_spec(1)]
    args = [xin, xin, xin]
    if shortcut_x is not None:
        Csc = shortcut_x.shape[2]
        in_specs.append(pl.BlockSpec((1, 1, Csc, HWp),
                                     lambda b, d: (b, d, 0, 0)))
        args.append(shortcut_x)
    in_specs += [pl.BlockSpec((1, Cin, 1), lambda b, d: (b, 0, 0)),
                 pl.BlockSpec((1, Cin, 1), lambda b, d: (b, 0, 0)),
                 pl.BlockSpec((1, HWp), lambda b, d: (0, 0)),
                 pl.BlockSpec(tuple(w.shape), lambda b, d: (0, 0)),
                 pl.BlockSpec(tuple(bias.shape), lambda b, d: (0, 0))]
    args += [scale, shift, mask, w, bias]

    o_shape = jax.ShapeDtypeStruct((B, D, out_filters, HWp), xin.dtype)
    o_spec = pl.BlockSpec((1, 1, out_filters, HWp), lambda b, d: (b, d, 0, 0))
    scratch = [pltpu.VMEM((K, HWp), jnp.float32)]

    if emit_stats:
        stat_shape = jax.ShapeDtypeStruct((B, out_filters, 1), jnp.float32)
        stat_spec = pl.BlockSpec((1, out_filters, 1), lambda b, d: (b, 0, 0))
        kernel = functools.partial(_conv1_kernel, D=D, taps=taps, Cin=Cin)
        h, s, q = pl.pallas_call(
            kernel,
            out_shape=(o_shape, stat_shape, stat_shape),
            grid=(B, D),
            in_specs=in_specs,
            out_specs=(o_spec, stat_spec, stat_spec),
            scratch_shapes=scratch,
            compiler_params=pltpu.CompilerParams(
                # depth must be sequential: GN2-stat accumulators are resident
                # across d.  Batch stays "parallel" for megacore / v7x 2-TC.
                dimension_semantics=("parallel", "arbitrary")),
        )(*args)
        return h, s, q

    kernel = functools.partial(_conv2_kernel, D=D, taps=taps, Cin=Cin,
                               Fout=out_filters)
    return pl.pallas_call(
        kernel,
        out_shape=o_shape,
        grid=(B, D),
        in_specs=in_specs,
        out_specs=o_spec,
        scratch_shapes=scratch,
        compiler_params=pltpu.CompilerParams(
            dimension_semantics=("parallel", "parallel")),
    )(*args)


# ------------------------------ ResBlock forward -----------------------------

def resblock_forward(x, params, groups, *, eps=1e-5):
    """x: (B, C, D, H, W) float32 (NCDHW, PyTorch convention)."""
    B, C, D, H, W = x.shape
    F = params["b1"].shape[0]
    Hp, Wp = H + 2, W + 2
    HWp = Hp * Wp
    nvox = D * H * W

    # NCDHW -> (B, D, C, (H+2)*(W+2)): padded flat plane on the 128-lane axis.
    xc = jnp.transpose(x, (0, 2, 1, 3, 4))                          # (B,D,C,H,W)
    xpad = jnp.pad(xc, ((0, 0), (0, 0), (0, 0), (1, 1), (1, 1)))
    xpad = xpad.reshape(B, D, C, HWp).astype(jnp.float32)

    # interior mask over the padded flat plane (hoisted out of the kernels).
    hpi = jnp.arange(Hp)
    wpi = jnp.arange(Wp)
    m2 = ((hpi >= 1) & (hpi <= H))[:, None] & ((wpi >= 1) & (wpi <= W))[None, :]
    mask = m2.astype(jnp.float32).reshape(1, HWp)

    # PyTorch conv weights -> K-stacked GEMM layouts (K order: kd, kh, kw, cin).
    w1 = jnp.transpose(params["w1"], (0, 2, 3, 4, 1)).reshape(F, 27 * C)
    b1 = params["b1"].reshape(F, 1)
    w2 = jnp.transpose(params["w2"], (0, 2, 3, 4, 1)).reshape(F, 27 * F)
    wsc = params["w_sc"][:, :, 0, 0, 0]                             # (F, C)
    # conv2 + fused 1x1x1 shortcut as a single GEMM: rows 0..F-1 = main path,
    # rows F..2F-1 = shortcut path (separate ReLUs applied in-kernel).
    w2cat = jnp.concatenate(
        [jnp.concatenate([w2, jnp.zeros((F, C), w2.dtype)], axis=1),
         jnp.concatenate([jnp.zeros((F, 27 * F), w2.dtype), wsc], axis=1)],
        axis=0)                                                     # (2F, 27F+C)
    b2cat = jnp.concatenate([params["b2"], params["b_sc"]]).reshape(2 * F, 1)

    # GroupNorm1 statistics (single Pallas pass over x, per-plane blocks).
    s1, q1 = _plane_stats(xpad, mask)
    sc1, sh1 = _gn_finalize(s1, q1, params["gn1_w"], params["gn1_b"],
                            groups, nvox, eps)

    # GN1-apply + conv1(3^3) + bias + ReLU, GN2 statistics fused in epilogue.
    h1, s2, q2 = _fused_gn_conv3d(xpad, sc1, sh1, mask, w1, b1,
                                  D=D, H=H, W=W, out_filters=F,
                                  emit_stats=True)
    sc2, sh2 = _gn_finalize(s2, q2, params["gn2_w"], params["gn2_b"],
                            groups, nvox, eps)

    # GN2-apply + conv2(3^3) + bias + ReLU + fused 1x1x1 shortcut(+ReLU) add.
    out = _fused_gn_conv3d(h1, sc2, sh2, mask, w2cat, b2cat,
                           D=D, H=H, W=W, out_filters=F,
                           emit_stats=False, shortcut_x=xpad)

    # un-pad + back to NCDHW.
    out = out.reshape(B, D, F, Hp, Wp)[:, :, :, 1:H + 1, 1:W + 1]
    return jnp.transpose(out, (0, 2, 1, 3, 4))


# ----------------------------- pure-JAX reference ----------------------------

def _ref_forward(x, params, groups, eps=1e-5):
    def conv3d(h, w, b):
        out = lax.conv_general_dilated(
            h, w, window_strides=(1, 1, 1), padding="SAME",
            dimension_numbers=("NCDHW", "OIDHW", "NCDHW"),
            precision=lax.Precision.HIGHEST)
        return out + b[None, :, None, None, None]

    def gn(h, gamma, beta):
        Bb, Cc = h.shape[:2]
        hg = h.reshape(Bb, groups, Cc // groups, -1)
        mean = hg.mean(axis=(2, 3), keepdims=True)
        var = hg.var(axis=(2, 3), keepdims=True)
        hn = ((hg - mean) / jnp.sqrt(var + eps)).reshape(h.shape)
        return (hn * gamma[None, :, None, None, None]
                + beta[None, :, None, None, None])

    relu = lambda a: jnp.maximum(a, 0.0)
    residual = relu(conv3d(x, params["w_sc"], params["b_sc"]))
    out = gn(x, params["gn1_w"], params["gn1_b"])
    out = relu(conv3d(out, params["w1"], params["b1"]))
    out = gn(out, params["gn2_w"], params["gn2_b"])
    out = relu(conv3d(out, params["w2"], params["b2"]))
    return out + residual


# ------------------------------------ main -----------------------------------

def _init_params(key, C, F):
    ks = jax.random.split(key, 10)
    return {
        "w_sc": 0.1 * jax.random.normal(ks[0], (F, C, 1, 1, 1), jnp.float32),
        "b_sc": 0.05 * jax.random.normal(ks[1], (F,), jnp.float32),
        "w1": 0.1 * jax.random.normal(ks[2], (F, C, 3, 3, 3), jnp.float32),
        "b1": 0.05 * jax.random.normal(ks[3], (F,), jnp.float32),
        "w2": 0.1 * jax.random.normal(ks[4], (F, F, 3, 3, 3), jnp.float32),
        "b2": 0.05 * jax.random.normal(ks[5], (F,), jnp.float32),
        "gn1_w": 1.0 + 0.1 * jax.random.normal(ks[6], (C,), jnp.float32),
        "gn1_b": 0.05 * jax.random.normal(ks[7], (C,), jnp.float32),
        "gn2_w": 1.0 + 0.1 * jax.random.normal(ks[8], (F,), jnp.float32),
        "gn2_b": 0.05 * jax.random.normal(ks[9], (F,), jnp.float32),
    }


if __name__ == "__main__":
    B, C, F, G = 2, 4, 8, 2          # batch, channels, filters, groups
    D, H, W = 8, 14, 14              # (H+2)*(W+2) = 256 -> lane-aligned planes
    key = jax.random.PRNGKey(0)
    kx, kp = jax.random.split(key)
    x = jax.random.normal(kx, (B, C, D, H, W), jnp.float32)
    params = _init_params(kp, C, F)

    out = jax.block_until_ready(resblock_forward(x, params, G))
    ref = jax.block_until_ready(_ref_forward(x, params, G))

    assert out.shape == (B, F, D, H, W), out.shape
    np.testing.assert_allclose(np.asarray(out), np.asarray(ref),
                               rtol=2e-4, atol=2e-4)
    print("KERNEL_OK")
</pallas_src>

<mosaic_0001>
module attributes {stable_mosaic.version = 11 : i64} {
  func.func @_plane_stats_kernel(%arg0: i32, %arg1: i32, %arg2: memref<1x1x4x256xf32, #tpu.memory_space<vmem>>, %arg3: memref<1x256xf32, #tpu.memory_space<vmem>>, %arg4: memref<1x4x1xf32, #tpu.memory_space<vmem>>, %arg5: memref<1x4x1xf32, #tpu.memory_space<vmem>>) attributes {dimension_semantics = [#tpu.dimension_semantics<parallel>, #tpu.dimension_semantics<arbitrary>], iteration_bounds = array<i64: 2, 8>, scalar_prefetch = 0 : i64, scratch_operands = 0 : i64, tpu.core_type = #tpu.core_type<tc>, window_params = [{transform_indices = @transform_0, window_bounds = array<i64: 1, 1, 4, 256>}, {pipeline_mode = #tpu.pipeline_mode<synchronous>, transform_indices = @transform_1, window_bounds = array<i64: 1, 256>}, {transform_indices = @transform_2, window_bounds = array<i64: 1, 4, 1>}, {transform_indices = @transform_3, window_bounds = array<i64: 1, 4, 1>}]} {
    %c0_i32 = arith.constant 0 : i32
    %0 = arith.cmpi eq, %arg1, %c0_i32 : i32
    %1 = arith.extui %0 : i1 to i32
    %c0_i32_0 = arith.constant 0 : i32
    %2 = arith.cmpi ne, %1, %c0_i32_0 : i32
    scf.if %2 {
      %cst_19 = arith.constant 0.000000e+00 : f32
      %21 = vector.broadcast %cst_19 : f32 to vector<1x4x1xf32>
      %c0_20 = arith.constant 0 : index
      %c0_21 = arith.constant 0 : index
      %c0_22 = arith.constant 0 : index
      %22 = vector.load %arg4[%c0_20, %c0_21, %c0_22] : memref<1x4x1xf32, #tpu.memory_space<vmem>>, vector<1x4x1xf32>
      tpu.vector_store %arg4[%c0_20, %c0_21, %c0_22], %21 {strides = array<i32>} : memref<1x4x1xf32, #tpu.memory_space<vmem>>, vector<1x4x1xf32>,
      %cst_23 = arith.constant 0.000000e+00 : f32
      %23 = vector.broadcast %cst_23 : f32 to vector<1x4x1xf32>
      %c0_24 = arith.constant 0 : index
      %c0_25 = arith.constant 0 : index
      %c0_26 = arith.constant 0 : index
      %24 = vector.load %arg5[%c0_24, %c0_25, %c0_26] : memref<1x4x1xf32, #tpu.memory_space<vmem>>, vector<1x4x1xf32>
      tpu.vector_store %arg5[%c0_24, %c0_25, %c0_26], %23 {strides = array<i32>} : memref<1x4x1xf32, #tpu.memory_space<vmem>>, vector<1x4x1xf32>,
    } else {
    }
    %c0 = arith.constant 0 : index
    %c0_1 = arith.constant 0 : index
    %c0_2 = arith.constant 0 : index
    %c0_3 = arith.constant 0 : index
    %3 = vector.load %arg2[%c0, %c0_1, %c0_2, %c0_3] : memref<1x1x4x256xf32, #tpu.memory_space<vmem>>, vector<1x1x4x256xf32>
    %4 = vector.shape_cast %3 : vector<1x1x4x256xf32> to vector<4x256xf32>
    %c0_4 = arith.constant 0 : index
    %c0_5 = arith.constant 0 : index
    %5 = vector.load %arg3[%c0_4, %c0_5] : memref<1x256xf32, #tpu.memory_space<vmem>>, vector<1x256xf32>
    %6 = vector.broadcast %5 : vector<1x256xf32> to vector<4x256xf32>
    %7 = arith.mulf %4, %6 : vector<4x256xf32>
    %c0_6 = arith.constant 0 : index
    %c0_7 = arith.constant 0 : index
    %c0_8 = arith.constant 0 : index
    %8 = vector.load %arg4[%c0_6, %c0_7, %c0_8] : memref<1x4x1xf32, #tpu.memory_space<vmem>>, vector<1x4x1xf32>
    %cst = arith.constant dense<0.000000e+00> : vector<4xf32>
    %9 = vector.multi_reduction <add>, %7, %cst [1] : vector<4x256xf32> to vector<4xf32>
    %10 = vector.shape_cast %9 : vector<4xf32> to vector<4x1xf32>
    %11 = vector.shape_cast %10 : vector<4x1xf32> to vector<1x4x1xf32>
    %12 = arith.addf %8, %11 : vector<1x4x1xf32>
    %c0_9 = arith.constant 0 : index
    %c0_10 = arith.constant 0 : index
    %c0_11 = arith.constant 0 : index
    %13 = vector.load %arg4[%c0_9, %c0_10, %c0_11] : memref<1x4x1xf32, #tpu.memory_space<vmem>>, vector<1x4x1xf32>
    tpu.vector_store %arg4[%c0_9, %c0_10, %c0_11], %12 {strides = array<i32>} : memref<1x4x1xf32, #tpu.memory_space<vmem>>, vector<1x4x1xf32>,
    %c0_12 = arith.constant 0 : index
    %c0_13 = arith.constant 0 : index
    %c0_14 = arith.constant 0 : index
    %14 = vector.load %arg5[%c0_12, %c0_13, %c0_14] : memref<1x4x1xf32, #tpu.memory_space<vmem>>, vector<1x4x1xf32>
    %15 = arith.mulf %7, %7 : vector<4x256xf32>
    %cst_15 = arith.constant dense<0.000000e+00> : vector<4xf32>
    %16 = vector.multi_reduction <add>, %15, %cst_15 [1] : vector<4x256xf32> to vector<4xf32>
    %17 = vector.shape_cast %16 : vector<4xf32> to vector<4x1xf32>
    %18 = vector.shape_cast %17 : vector<4x1xf32> to vector<1x4x1xf32>
    %19 = arith.addf %14, %18 : vector<1x4x1xf32>
    %c0_16 = arith.constant 0 : index
    %c0_17 = arith.constant 0 : index
    %c0_18 = arith.constant 0 : index
    %20 = vector.load %arg5[%c0_16, %c0_17, %c0_18] : memref<1x4x1xf32, #tpu.memory_space<vmem>>, vector<1x4x1xf32>
    tpu.vector_store %arg5[%c0_16, %c0_17, %c0_18], %19 {strides = array<i32>} : memref<1x4x1xf32, #tpu.memory_space<vmem>>, vector<1x4x1xf32>,
    return
  }
  func.func @transform_0(%arg0: i32, %arg1: i32) -> (i32, i32, i32, i32) {
    %c0_i32 = arith.constant 0 : i32
    %c0_i32_0 = arith.constant 0 : i32
    %c0_i32_1 = arith.constant 0 : i32
    return %arg0, %arg1, %c0_i32, %c0_i32_0 : i32, i32, i32, i32
  }
  func.func @transform_1(%arg0: i32, %arg1: i32) -> (i32, i32) {
    %c0_i32 = arith.constant 0 : i32
    %c0_i32_0 = arith.constant 0 : i32
    %c0_i32_1 = arith.constant 0 : i32
    return %c0_i32, %c0_i32_0 : i32, i32
  }
  func.func @transform_2(%arg0: i32, %arg1: i32) -> (i32, i32, i32) {
    %c0_i32 = arith.constant 0 : i32
    %c0_i32_0 = arith.constant 0 : i32
    %c0_i32_1 = arith.constant 0 : i32
    return %arg0, %c0_i32, %c0_i32_0 : i32, i32, i32
  }
  func.func @transform_3(%arg0: i32, %arg1: i32) -> (i32, i32, i32) {
    %c0_i32 = arith.constant 0 : i32
    %c0_i32_0 = arith.constant 0 : i32
    %c0_i32_1 = arith.constant 0 : i32
    return %arg0, %c0_i32, %c0_i32_0 : i32, i32, i32
  }
}

</mosaic_0001>

<llo_original>
// kernel: tpu_custom_call.1
$region0: #{tpu_custom_call.1}
  #allocation0 [shape = 'u32[]', space=smem, size = 0x4, offset = 0x4, fixed_abs, tag = 'smem constant byte address 0x4 - core index']
  #allocation1 [shape = 'u32[144,128]{1,0:T(1,128)}', space=vmem, size = 0x12000, scoped, tag = 'internal scratch']
  %s0 = inlined_call_operand.hbm [shape: f32[2,8,4,256], index: 0, kind: input, shape index: {}]
  %s1 = inlined_call_operand.vmem [shape: f32[1,256], index: 1, kind: input, shape index: {}]
  %s2 = inlined_call_operand.vmem [shape: f32[2,4,1], index: 2, kind: output, shape index: {0}]
  %s3 = inlined_call_operand.vmem [shape: f32[2,4,1], index: 3, kind: output, shape index: {1}]
  %4 = xla_tuple %s2, %s3
  %s5 = sld [smem:[#allocation0]]
  $region57: #{tpu_custom_call.1} parent=0
    _
  %s7 = ssub.s32 1, %s5
  %s8 = scalar_select 0, %s7, %s5
  $region1: #{tpu_custom_call.1} parent=0
    #allocation2 [shape = 'u8[8192]{0}', space=vmem, size = 0x2000, scoped, tag = 'input window, operand 0']
    #allocation3 [shape = 's32[2]{0}', space=sflag, size = 0x8, scoped, tag = 'scoped memory for tpu_custom_call.1']
    %9 = vsyncpa [#allocation3], 0
    %s10 = scalar_lea.sflag [#allocation3], 1
    %11 = vsyncpa %s10, 0
    loop: start=0, step=1, limit=18
    $region2: #{tpu_custom_call.1} parent=1 // loop_pre_header
      _
    $region3: #{tpu_custom_call.1} parent=1 // loop_header
      %s13 = sphi 0, %s17
      %p14 = scmp.ge.s32.totalorder %s13, 18
      %s20 = sphi 0, %s32
      %s21 = sphi 0, %s28
      %s22 = sphi 0, %s20
      %s23 = sphi 0, %s21
      %s24 = sphi 0, %s22
      %s25 = sphi 0, %s23
      %s37 = sphi 0, %s39
      %s40 = sphi 0, %s37
      %s41 = sphi 0, %s40
      %s57 = sphi 0, %s41
      %s61 = sphi 0, %s61
      %s63 = sphi 0, %s61
      %s64 = sphi 0, %s63
      %s78 = sphi 0, %s64
      %s84 = sphi 0, %s86
      %s87 = sphi 0, %s84
      %s88 = sphi 0, %s87
      %s104 = sphi 0, %s88
      %s110 = sphi 0, %s112
      %s113 = sphi 0, %s110
      %s114 = sphi 0, %s113
      %s130 = sphi 0, %s114
    $region4: #{tpu_custom_call.1} parent=1 // loop_header_branch
      %16 = sbr.rel (%p14) target = $region8
    $region5: #{tpu_custom_call.1} parent=1 // loop_body
      %s18 = ssub.s32 %s13, 1
      %s19 = ssub.s32 %s13, 2
      %s26 = sadd.s32 1, %s21
      %p27 = scmp.ge.s32.totalorder %s26, 8
      %s28 = scalar_select %p27, 0, %s26
      %s29 = sadd.s32 1, %s20
      %s30 = scalar_select %p27, %s29, %s20
      %p31 = scmp.ge.s32.totalorder %s30, 2
      %s32 = scalar_select %p31, 0, %s30
      %s33 = ssub.s32 %s20, %s32
      %s34 = ssub.s32 %s21, %s28
      %s35 = sor.u32 %s33, %s34
      %p36 = scmp.eq.s32.totalorder %s35, 0
      %s38 = sadd.s32 %s37, 1
      %s39 = scalar_select %p36, %s37, %s38
      %p42 = pneg %p36
      %p43 = scmp.eq.s32.totalorder %s13, 15
      %p44 = por %p42, %p43
      %p45 = scmp.ne.s32.totalorder %s37, %s40
      %p46 = scmp.eq.s32.totalorder %s13, 0
      %p47 = por %p45, %p46
      %p48 = scmp.ne.s32.totalorder %s37, %s40
      %p49 = scmp.eq.s32.totalorder %s18, 15
      %p50 = por %p48, %p49
      %p51 = scmp.ne.s32.totalorder %s40, %s41
      %p52 = scmp.eq.s32.totalorder %s18, 0
      %p53 = por %p51, %p52
      %p54 = scmp.ne.s32.totalorder %s40, %s41
      %p55 = scmp.eq.s32.totalorder %s19, 15
      %p56 = por %p54, %p55
      %p58 = scmp.ne.s32.totalorder %s41, %s57
      %p59 = scmp.eq.s32.totalorder %s19, 0
      %p60 = por %p58, %p59
      %s62 = sadd.s32 %s61, 1
      %p65 = scmp.eq.s32.totalorder %s13, 15
      %p66 = scmp.ne.s32.totalorder %s61, %s63
      %p67 = scmp.eq.s32.totalorder %s13, 0
      %p68 = por %p66, %p67
      %p69 = scmp.ne.s32.totalorder %s61, %s63
      %p70 = scmp.eq.s32.totalorder %s18, 15
      %p71 = por %p69, %p70
      %p72 = scmp.ne.s32.totalorder %s63, %s64
      %p73 = scmp.eq.s32.totalorder %s18, 0
      %p74 = por %p72, %p73
      %p75 = scmp.ne.s32.totalorder %s63, %s64
      %p76 = scmp.eq.s32.totalorder %s19, 15
      %p77 = por %p75, %p76
      %p79 = scmp.ne.s32.totalorder %s64, %s78
      %p80 = scmp.eq.s32.totalorder %s19, 0
      %p81 = por %p79, %p80
      %s82 = ssub.s32 %s20, %s32
      %p83 = scmp.eq.s32.totalorder %s82, 0
      %s85 = sadd.s32 %s84, 1
      %s86 = scalar_select %p83, %s84, %s85
      %p89 = pneg %p83
      %p90 = scmp.eq.s32.totalorder %s13, 15
      %p91 = por %p89, %p90
      %p92 = scmp.ne.s32.totalorder %s84, %s87
      %p93 = scmp.eq.s32.totalorder %s13, 0
      %p94 = por %p92, %p93
      %p95 = scmp.ne.s32.totalorder %s84, %s87
      %p96 = scmp.eq.s32.totalorder %s18, 15
      %p97 = por %p95, %p96
      %p98 = scmp.ne.s32.totalorder %s87, %s88
      %p99 = scmp.eq.s32.totalorder %s18, 0
      %p100 = por %p98, %p99
      %p101 = scmp.ne.s32.totalorder %s87, %s88
      %p102 = scmp.eq.s32.totalorder %s19, 15
      %p103 = por %p101, %p102
      %p105 = scmp.ne.s32.totalorder %s88, %s104
      %p106 = scmp.eq.s32.totalorder %s19, 0
      %p107 = por %p105, %p106
      %s108 = ssub.s32 %s20, %s32
      %p109 = scmp.eq.s32.totalorder %s108, 0
      %s111 = sadd.s32 %s110, 1
      %s112 = scalar_select %p109, %s110, %s111
      %p115 = pneg %p109
      %p116 = scmp.eq.s32.totalorder %s13, 15
      %p117 = por %p115, %p116
      %p118 = scmp.ne.s32.totalorder %s110, %s113
      %p119 = scmp.eq.s32.totalorder %s13, 0
      %p120 = por %p118, %p119
      %p121 = scmp.ne.s32.totalorder %s110, %s113
      %p122 = scmp.eq.s32.totalorder %s18, 15
      %p123 = por %p121, %p122
      %p124 = scmp.ne.s32.totalorder %s113, %s114
      %p125 = scmp.eq.s32.totalorder %s18, 0
      %p126 = por %p124, %p125
      %p127 = scmp.ne.s32.totalorder %s113, %s114
      %p128 = scmp.eq.s32.totalorder %s19, 15
      %p129 = por %p127, %p128
      %p131 = scmp.ne.s32.totalorder %s114, %s130
      %p132 = scmp.eq.s32.totalorder %s19, 0
      %p133 = por %p131, %p132
      %p134 = scmp.le.s32.totalorder 1, %s13
      %p135 = scmp.lt.s32.totalorder %s13, 17
      %p136 = pnand %p134, %p135
      %p137 = pneg %p136
      // Predicated region
      $region9: #{tpu_custom_call.1} parent=5 // pred_check
        _
      $region10: #{tpu_custom_call.1} parent=5 // pred_check_branch
        %139 = sbr.rel (%p136) target = $region12
      $region11: #{tpu_custom_call.1} parent=5 // pred_region
        %s140 = ssub.s32 %s13, 1
        // Predicated region
        $region13: #{tpu_custom_call.1} parent=11 // pred_check
          %p141 = pneg %p74
        $region14: #{tpu_custom_call.1} parent=11 // pred_check_branch
          %143 = sbr.rel (%p141) target = $region16
        $region15: #{tpu_custom_call.1} parent=11 // pred_region
          _
        $region16: #{tpu_custom_call.1} parent=11 // pred_fallthru
          _
      $region12: #{tpu_custom_call.1} parent=5 // pred_fallthru
        _
      %p144 = scmp.lt.s32.totalorder %s13, 16
      // Predicated region
      $region17: #{tpu_custom_call.1} parent=5 // pred_check
        %p145 = pneg %p144
      $region18: #{tpu_custom_call.1} parent=5 // pred_check_branch
        %147 = sbr.rel (%p145) target = $region20
      $region19: #{tpu_custom_call.1} parent=5 // pred_region
        // Predicated region
        $region21: #{tpu_custom_call.1} parent=19 // pred_check
          %p148 = pneg %p47
        $region22: #{tpu_custom_call.1} parent=19 // pred_check_branch
          %150 = sbr.rel (%p148) target = $region24
        $region23: #{tpu_custom_call.1} parent=19 // pred_region
          %s151 = sand.u32 %s37, 1
          %s152 = scalar_lea.sflag [#allocation3], %s151
          %s153 = sand.u32 %s37, 1
          %s154 = smul.addr %s153, 8
          %s155 = scalar_lea.vmem [#allocation2], %s154
          %s157 = ssub.s32 128, 128
          %158 = vsyncadd %s152, %s157
          %s159 = smul.addr %s21, 2
          %s160 = smul.addr %s20, 16
          %s161 = sadd.s32 %s159, %s160
          %s162 = smul.addr %s161, 64
          %s163 = scalar_lea.hbm %s0, %s162
          %s165 = sshll.u32 %s155, 4
          %s166 = int_to_ptr.vmem [resolvable:$true] %s165
          %168 = dma.hbm_to_vmem [thread:$0]  %s163, 128, %s166, %s152
        $region24: #{tpu_custom_call.1} parent=19 // pred_fallthru
          _
      $region20: #{tpu_custom_call.1} parent=5 // pred_fallthru
        _
      %p169 = scmp.le.s32.totalorder 1, %s13
      %p170 = scmp.lt.s32.totalorder %s13, 17
      %p171 = pnand %p169, %p170
      %p172 = pneg %p171
      // Predicated region
      $region25: #{tpu_custom_call.1} parent=5 // pred_check
        _
      $region26: #{tpu_custom_call.1} parent=5 // pred_check_branch
        %174 = sbr.rel (%p171) target = $region28
      $region27: #{tpu_custom_call.1} parent=5 // pred_region
        %s175 = ssub.s32 %s13, 1
        %s176 = sand.u32 %s40, 1
        %s177 = scalar_lea.sflag [#allocation3], %s176
        %s178 = sand.u32 %s40, 1
        %s179 = smul.addr %s178, 8
        %s180 = scalar_lea.vmem [#allocation2], %s179
        // Predicated region
        $region29: #{tpu_custom_call.1} parent=27 // pred_check
          %p181 = pneg %p53
        $region30: #{tpu_custom_call.1} parent=27 // pred_check_branch
          %183 = sbr.rel (%p181) target = $region32
        $region31: #{tpu_custom_call.1} parent=27 // pred_region
          %184 = dma.done %s177, 128
        $region32: #{tpu_custom_call.1} parent=27 // pred_fallthru
          _
        %s185 = sand.u32 %s40, 1
        %s186 = scalar_lea.sflag [#allocation3], %s185
        %s187 = sand.u32 %s40, 1
        %s188 = smul.addr %s187, 8
        %s189 = scalar_lea.vmem [#allocation2], %s188
        %p190 = pneg %p53
        %p191 = pneg %p50
        %p192 = pneg %p74
        %p193 = pneg %p71
        %p194 = pneg %p100
        %p195 = pneg %p97
        %p196 = scmp.lt.s32.totalorder %s22, 1
        %s197 = scalar_select %p196, %s22, 1
        %s198 = smul.addr %s197, 4
        %s199 = scalar_lea.vmem %s2, %s198
        %p200 = pneg %p126
        %p201 = pneg %p123
        %p202 = scmp.lt.s32.totalorder %s22, 1
        %s203 = scalar_select %p202, %s22, 1
        %s204 = smul.addr %s203, 4
        %s205 = scalar_lea.vmem %s3, %s204
        %p206 = scmp.lt.s32.totalorder %s22, 1
        %s207 = scalar_select %p206, %s22, 1
        %s208 = smul.addr %s207, 4
        %s209 = scalar_lea.vmem %s2, %s208
        %p210 = scmp.lt.s32.totalorder %s22, 1
        %s211 = scalar_select %p210, %s22, 1
        %s212 = smul.addr %s211, 4
        %s213 = scalar_lea.vmem %s3, %s212
        %p214 = scmp.eq.s32.totalorder %s23, 0
        // Predicated region
        $region33: #{tpu_custom_call.1} parent=27 // pred_check
          %p215 = pneg %p214
        $region34: #{tpu_custom_call.1} parent=27 // pred_check_branch
          %217 = sbr.rel (%p215) target = $region36
        $region35: #{tpu_custom_call.1} parent=27 // pred_region
          %vm218 = vcmask 3072
          %219 = vst.msk [vmem:[%s209] sm:$0xf] %vm218, 0.0
          %220 = vst.msk [vmem:[%s213] sm:$0xf] %vm218, 0.0
        $region36: #{tpu_custom_call.1} parent=27 // pred_fallthru
          _
        %v221 = vld [vmem:[%s180] sm:$0xff]
        %v222 = vld [vmem:[%s1] sm:$0x3]
        %v224 = vlaneseq
        %v225 = vshrl.u32 %v224, 7
        %v226 = vsub.s32 0, %v225
        %v227 = vrot.slane %v222, %v226
        %v228 = vlaneseq
        %v229 = vshrl.u32 %v228, 7
        %v230 = vsub.s32 1, %v229
        %v231 = vrot.slane %v222, %v230
        %v232 = vcombine.low %v227, %v231
        %v234 = vmul.f32 %v221, %v232
        %v235 = vld [vmem:[%s209] sm:$0xf]
        %v237 = vcombine.high %v234, %v234
        %vm239 = vcmask 1043456
        %v240 = vsel %vm239, %v234, 0.0
        %v241 = vsel %vm239, %v237, 0.0
        %v242 = vadd.f32 %v240, %v241
        %243 = vadd.xlane.f32.xlu0 %v242
        %v244 = vpop.xlane.xlu0 %243
        %v245 = vadd.f32 %v235, %v244
        %vm246 = vcmask 3072
        %247 = vst.msk [vmem:[%s209] sm:$0xf] %vm246, %v245
        %v248 = vld [vmem:[%s213] sm:$0xf]
        %v249 = vmul.f32 %v234, %v234
        %v251 = vcombine.high %v249, %v249
        %v253 = vsel %vm239, %v249, 0.0
        %v254 = vsel %vm239, %v251, 0.0
        %v255 = vadd.f32 %v253, %v254
        %256 = vadd.xlane.f32.xlu0 %v255
        %v257 = vpop.xlane.xlu0 %256
        %v258 = vadd.f32 %v248, %v257
        %259 = vst.msk [vmem:[%s213] sm:$0xf] %vm246, %v258
        %p260 = scmp.lt.s32.totalorder %s22, 1
        %s261 = scalar_select %p260, %s22, 1
        %s262 = smul.addr %s261, 4
        %s263 = scalar_lea.vmem %s2, %s262
        %p264 = scmp.lt.s32.totalorder %s22, 1
        %s265 = scalar_select %p264, %s22, 1
        %s266 = smul.addr %s265, 4
        %s267 = scalar_lea.vmem %s3, %s266
        // Predicated region
        $region37: #{tpu_custom_call.1} parent=27 // pred_check
          %p268 = pneg %p97
        $region38: #{tpu_custom_call.1} parent=27 // pred_check_branch
          %270 = sbr.rel (%p268) target = $region40
        $region39: #{tpu_custom_call.1} parent=27 // pred_region
          _
        $region40: #{tpu_custom_call.1} parent=27 // pred_fallthru
          _
        // Predicated region
        $region41: #{tpu_custom_call.1} parent=27 // pred_check
          %p271 = pneg %p123
        $region42: #{tpu_custom_call.1} parent=27 // pred_check_branch
          %273 = sbr.rel (%p271) target = $region44
        $region43: #{tpu_custom_call.1} parent=27 // pred_region
          _
        $region44: #{tpu_custom_call.1} parent=27 // pred_fallthru
          _
      $region28: #{tpu_custom_call.1} parent=5 // pred_fallthru
        _
      %p274 = scmp.le.s32.totalorder 2, %s13
      // Predicated region
      $region45: #{tpu_custom_call.1} parent=5 // pred_check
        %p275 = pneg %p274
      $region46: #{tpu_custom_call.1} parent=5 // pred_check_branch
        %277 = sbr.rel (%p275) target = $region48
      $region47: #{tpu_custom_call.1} parent=5 // pred_region
        %s278 = ssub.s32 %s13, 2
        // Predicated region
        $region49: #{tpu_custom_call.1} parent=47 // pred_check
          %p279 = pneg %p103
        $region50: #{tpu_custom_call.1} parent=47 // pred_check_branch
          %281 = sbr.rel (%p279) target = $region52
        $region51: #{tpu_custom_call.1} parent=47 // pred_region
          %p282 = scmp.lt.s32.totalorder %s24, 1
          %s283 = scalar_select %p282, %s24, 1
          %s284 = smul.addr %s283, 4
          %s285 = scalar_lea.vmem %s2, %s284
        $region52: #{tpu_custom_call.1} parent=47 // pred_fallthru
          _
        // Predicated region
        $region53: #{tpu_custom_call.1} parent=47 // pred_check
          %p286 = pneg %p129
        $region54: #{tpu_custom_call.1} parent=47 // pred_check_branch
          %288 = sbr.rel (%p286) target = $region56
        $region55: #{tpu_custom_call.1} parent=47 // pred_region
          %p289 = scmp.lt.s32.totalorder %s24, 1
          %s290 = scalar_select %p289, %s24, 1
          %s291 = smul.addr %s290, 4
          %s292 = scalar_lea.vmem %s3, %s291
        $region56: #{tpu_custom_call.1} parent=47 // pred_fallthru
          _
      $region48: #{tpu_custom_call.1} parent=5 // pred_fallthru
        _
    $region6: #{tpu_custom_call.1} parent=1 // loop_footer
      %s17 = sadd.s32 1, %s13
    $region7: #{tpu_custom_call.1} parent=1 // loop_footer_branch
      %12 = sbr.rel target = $region3
    $region8: #{tpu_custom_call.1} parent=1 // loop_exit
      _
    %293 = vsyncpa [#allocation3], 1
    %s294 = scalar_lea.sflag [#allocation3], 1
    %295 = vsyncpa %s294, 1

</llo_original>
